<compile_context>
chip_gen: v5e
topology: v5e:2x2
jax: 0.10.0
libtpu: 0.0.40
codegen_flags: <defaults>
</compile_context>

<pallas_src>
import jax
import jax.numpy as jnp
from jax.experimental import pallas as pl
from jax.experimental.pallas import tpu as pltpu

HIDDEN = 128


def _round_up(v, m):
    return (v + m - 1) // m * m


def _qnet_kernel(x_ref, w1_ref, b1_ref, w2_ref, b2_ref, w3_ref, b3_ref, out_ref):
    # x_ref:  (TB, K)
    # w1_ref: (K, 128),   b1_ref: (1, 128)
    # w2_ref: (128, 128), b2_ref: (1, 128)
    # w3_ref: (128, N),   b3_ref: (1, N)
    x = x_ref[...]

    h1 = jnp.dot(x, w1_ref[...], preferred_element_type=jnp.float32) + b1_ref[...]
    h1 = jnp.maximum(h1, 0.0)

    h2 = jnp.dot(h1, w2_ref[...], preferred_element_type=jnp.float32) + b2_ref[...]
    h2 = jnp.maximum(h2, 0.0)

    q = jnp.dot(h2, w3_ref[...], preferred_element_type=jnp.float32) + b3_ref[...]
    out_ref[...] = q.astype(out_ref.dtype)


def _pick_tile_b(B, K, N, *, max_tile_b=512, vmem_budget_bytes=12 * 1024 * 1024):
    """Batch tile: >=2 grid steps for B>8 (v7x megacore), <=512 rows, VMEM-safe."""
    if B <= 8:
        return B  # single block; block dim == full array dim satisfies (8,128) rule
    tile_b = min(max_tile_b, _round_up(pl.cdiv(B, 2), 8))
    # VMEM budget: resident weights + double-buffered x/out tiles + f32 h1/h2.
    weight_bytes = 4 * (K * HIDDEN + HIDDEN
                        + HIDDEN * HIDDEN + HIDDEN
                        + HIDDEN * N + N)
    per_row_bytes = 4 * (2 * (K + N) + 2 * HIDDEN)
    cap = (vmem_budget_bytes - weight_bytes) // max(per_row_bytes, 1)
    cap = max(8, (cap // 8) * 8)
    return max(8, min(tile_b, cap))


def q_network_forward(x, params, *, tile_b=None):
    """Forward pass of Q_network. x: (B, num_inputs) float32 -> (B, num_actions)."""
    w1, b1, w2, b2, w3, b3 = params
    B, num_inputs = x.shape
    num_actions = w3.shape[1]

    if tile_b is None:
        tile_b = _pick_tile_b(B, num_inputs, num_actions)
    tile_b = min(tile_b, B)
    if tile_b < B:
        # Sub-full-dim tiles must be sublane-aligned; ragged last block is masked.
        tile_b = max(8, (tile_b // 8) * 8)

    grid = (pl.cdiv(B, tile_b),)

    in_specs = [
        pl.BlockSpec((tile_b, num_inputs), lambda i: (i, 0)),   # x tile over batch
        pl.BlockSpec((num_inputs, HIDDEN), lambda i: (0, 0)),   # w1 (full, resident)
        pl.BlockSpec((1, HIDDEN), lambda i: (0, 0)),            # b1
        pl.BlockSpec((HIDDEN, HIDDEN), lambda i: (0, 0)),       # w2
        pl.BlockSpec((1, HIDDEN), lambda i: (0, 0)),            # b2
        pl.BlockSpec((HIDDEN, num_actions), lambda i: (0, 0)),  # w3
        pl.BlockSpec((1, num_actions), lambda i: (0, 0)),       # b3
    ]
    out_spec = pl.BlockSpec((tile_b, num_actions), lambda i: (i, 0))

    flops = 2 * B * (num_inputs * HIDDEN + HIDDEN * HIDDEN + HIDDEN * num_actions)
    bytes_accessed = 4 * (B * num_inputs + B * num_actions
                          + num_inputs * HIDDEN + HIDDEN
                          + HIDDEN * HIDDEN + HIDDEN
                          + HIDDEN * num_actions + num_actions)

    return pl.pallas_call(
        _qnet_kernel,
        out_shape=jax.ShapeDtypeStruct((B, num_actions), jnp.float32),
        grid_spec=pltpu.PrefetchScalarGridSpec(
            num_scalar_prefetch=0,
            grid=grid,
            in_specs=in_specs,
            out_specs=out_spec,
        ),
        compiler_params=pltpu.CompilerParams(
            dimension_semantics=("parallel",),
        ),
        cost_estimate=pl.CostEstimate(
            flops=flops, transcendentals=0, bytes_accessed=bytes_accessed),
    )(x, w1, b1, w2, b2, w3, b3)


def init_params(key, num_inputs, num_actions):
    """Deterministic synthetic init (matches nn.Linear fan-in uniform, stored transposed)."""
    k1, k2, k3, k4, k5, k6 = jax.random.split(key, 6)

    def uniform(k, shape, fan_in):
        bound = 1.0 / jnp.sqrt(jnp.float32(fan_in))
        return jax.random.uniform(k, shape, jnp.float32, -bound, bound)

    w1 = uniform(k1, (num_inputs, HIDDEN), num_inputs)
    b1 = uniform(k2, (1, HIDDEN), num_inputs)
    w2 = uniform(k3, (HIDDEN, HIDDEN), HIDDEN)
    b2 = uniform(k4, (1, HIDDEN), HIDDEN)
    w3 = uniform(k5, (HIDDEN, num_actions), HIDDEN)
    b3 = uniform(k6, (1, num_actions), HIDDEN)
    return (w1, b1, w2, b2, w3, b3)


def reference_forward(x, params):
    w1, b1, w2, b2, w3, b3 = params
    h1 = jnp.maximum(x @ w1 + b1, 0.0)
    h2 = jnp.maximum(h1 @ w2 + b2, 0.0)
    return h2 @ w3 + b3


if __name__ == "__main__":
    # TODO(synk): act()/act_hybrid() are host-side epsilon-greedy policy logic, not kernel work.
    num_inputs = 32
    num_actions = 8

    key = jax.random.PRNGKey(0)
    kx1, kx2, kp = jax.random.split(key, 3)
    params = init_params(kp, num_inputs, num_actions)

    # Small act()-style batch: single full-batch block (grid=(1,)).
    x_small = jax.random.normal(kx1, (8, num_inputs), jnp.float32)
    q_small = jax.block_until_ready(q_network_forward(x_small, params))
    ref_small = reference_forward(x_small, params)
    assert q_small.shape == (8, num_actions)
    assert jnp.allclose(q_small, ref_small, atol=1e-5, rtol=1e-5), "small-batch mismatch"

    # Ragged batch: B=20 with tile_b=16 -> 2 grid steps, masked last block.
    x_ragged = jax.random.normal(kx2, (20, num_inputs), jnp.float32)
    q_ragged = jax.block_until_ready(q_network_forward(x_ragged, params))
    ref_ragged = reference_forward(x_ragged, params)
    assert q_ragged.shape == (20, num_actions)
    assert jnp.allclose(q_ragged, ref_ragged, atol=1e-5, rtol=1e-5), "ragged-batch mismatch"

    print("KERNEL_OK")
</pallas_src>

<mosaic_0001>
module attributes {stable_mosaic.version = 11 : i64} {
  func.func @_qnet_kernel(%arg0: i32, %arg1: memref<8x32xf32, #tpu.memory_space<vmem>>, %arg2: memref<32x128xf32, #tpu.memory_space<vmem>>, %arg3: memref<1x128xf32, #tpu.memory_space<vmem>>, %arg4: memref<128x128xf32, #tpu.memory_space<vmem>>, %arg5: memref<1x128xf32, #tpu.memory_space<vmem>>, %arg6: memref<128x8xf32, #tpu.memory_space<vmem>>, %arg7: memref<1x8xf32, #tpu.memory_space<vmem>>, %arg8: memref<8x8xf32, #tpu.memory_space<vmem>>) attributes {dimension_semantics = [#tpu.dimension_semantics<parallel>], iteration_bounds = array<i64: 1>, scalar_prefetch = 0 : i64, scratch_operands = 0 : i64, tpu.core_type = #tpu.core_type<tc>, window_params = [{transform_indices = @transform_0, window_bounds = array<i64: 8, 32>}, {pipeline_mode = #tpu.pipeline_mode<synchronous>, transform_indices = @transform_1, window_bounds = array<i64: 32, 128>}, {pipeline_mode = #tpu.pipeline_mode<synchronous>, transform_indices = @transform_2, window_bounds = array<i64: 1, 128>}, {pipeline_mode = #tpu.pipeline_mode<synchronous>, transform_indices = @transform_3, window_bounds = array<i64: 128, 128>}, {pipeline_mode = #tpu.pipeline_mode<synchronous>, transform_indices = @transform_4, window_bounds = array<i64: 1, 128>}, {pipeline_mode = #tpu.pipeline_mode<synchronous>, transform_indices = @transform_5, window_bounds = array<i64: 128, 8>}, {pipeline_mode = #tpu.pipeline_mode<synchronous>, transform_indices = @transform_6, window_bounds = array<i64: 1, 8>}, {transform_indices = @transform_7, window_bounds = array<i64: 8, 8>}]} {
    %c0 = arith.constant 0 : index
    %c0_0 = arith.constant 0 : index
    %0 = vector.load %arg1[%c0, %c0_0] : memref<8x32xf32, #tpu.memory_space<vmem>>, vector<8x32xf32>
    %c0_1 = arith.constant 0 : index
    %c0_2 = arith.constant 0 : index
    %1 = vector.load %arg2[%c0_1, %c0_2] : memref<32x128xf32, #tpu.memory_space<vmem>>, vector<32x128xf32>
    %cst = arith.constant dense<0.000000e+00> : vector<8x128xf32>
    %2 = tpu.matmul %0, %1, %cst {dimension_numbers = #tpu.dot_dimension_numbers<[1], [0], [0], [1], [0, 0, 1, 1], [], []>} : vector<8x32xf32>, vector<32x128xf32>, vector<8x128xf32> -> vector<8x128xf32>
    %c0_3 = arith.constant 0 : index
    %c0_4 = arith.constant 0 : index
    %3 = vector.load %arg3[%c0_3, %c0_4] : memref<1x128xf32, #tpu.memory_space<vmem>>, vector<1x128xf32>
    %4 = vector.broadcast %3 : vector<1x128xf32> to vector<8x128xf32>
    %5 = arith.addf %2, %4 : vector<8x128xf32>
    %cst_5 = arith.constant 0.000000e+00 : f32
    %6 = vector.broadcast %cst_5 : f32 to vector<8x128xf32>
    %7 = arith.maximumf %5, %6 : vector<8x128xf32>
    %c0_6 = arith.constant 0 : index
    %c0_7 = arith.constant 0 : index
    %8 = vector.load %arg4[%c0_6, %c0_7] : memref<128x128xf32, #tpu.memory_space<vmem>>, vector<128x128xf32>
    %cst_8 = arith.constant dense<0.000000e+00> : vector<8x128xf32>
    %9 = tpu.matmul %7, %8, %cst_8 {dimension_numbers = #tpu.dot_dimension_numbers<[1], [0], [0], [1], [0, 0, 1, 1], [], []>} : vector<8x128xf32>, vector<128x128xf32>, vector<8x128xf32> -> vector<8x128xf32>
    %c0_9 = arith.constant 0 : index
    %c0_10 = arith.constant 0 : index
    %10 = vector.load %arg5[%c0_9, %c0_10] : memref<1x128xf32, #tpu.memory_space<vmem>>, vector<1x128xf32>
    %11 = vector.broadcast %10 : vector<1x128xf32> to vector<8x128xf32>
    %12 = arith.addf %9, %11 : vector<8x128xf32>
    %cst_11 = arith.constant 0.000000e+00 : f32
    %13 = vector.broadcast %cst_11 : f32 to vector<8x128xf32>
    %14 = arith.maximumf %12, %13 : vector<8x128xf32>
    %c0_12 = arith.constant 0 : index
    %c0_13 = arith.constant 0 : index
    %15 = vector.load %arg6[%c0_12, %c0_13] : memref<128x8xf32, #tpu.memory_space<vmem>>, vector<128x8xf32>
    %cst_14 = arith.constant dense<0.000000e+00> : vector<8x8xf32>
    %16 = tpu.matmul %14, %15, %cst_14 {dimension_numbers = #tpu.dot_dimension_numbers<[1], [0], [0], [1], [0, 0, 1, 1], [], []>} : vector<8x128xf32>, vector<128x8xf32>, vector<8x8xf32> -> vector<8x8xf32>
    %c0_15 = arith.constant 0 : index
    %c0_16 = arith.constant 0 : index
    %17 = vector.load %arg7[%c0_15, %c0_16] : memref<1x8xf32, #tpu.memory_space<vmem>>, vector<1x8xf32>
    %18 = vector.broadcast %17 : vector<1x8xf32> to vector<8x8xf32>
    %19 = arith.addf %16, %18 : vector<8x8xf32>
    %c0_17 = arith.constant 0 : index
    %c0_18 = arith.constant 0 : index
    %20 = vector.load %arg8[%c0_17, %c0_18] : memref<8x8xf32, #tpu.memory_space<vmem>>, vector<8x8xf32>
    tpu.vector_store %arg8[%c0_17, %c0_18], %19 {strides = array<i32>} : memref<8x8xf32, #tpu.memory_space<vmem>>, vector<8x8xf32>,
    return
  }
  func.func @transform_0(%arg0: i32) -> (i32, i32) {
    %c0_i32 = arith.constant 0 : i32
    %c0_i32_0 = arith.constant 0 : i32
    return %arg0, %c0_i32 : i32, i32
  }
  func.func @transform_1(%arg0: i32) -> (i32, i32) {
    %c0_i32 = arith.constant 0 : i32
    %c0_i32_0 = arith.constant 0 : i32
    %c0_i32_1 = arith.constant 0 : i32
    return %c0_i32, %c0_i32_0 : i32, i32
  }
  func.func @transform_2(%arg0: i32) -> (i32, i32) {
    %c0_i32 = arith.constant 0 : i32
    %c0_i32_0 = arith.constant 0 : i32
    %c0_i32_1 = arith.constant 0 : i32
    return %c0_i32, %c0_i32_0 : i32, i32
  }
  func.func @transform_3(%arg0: i32) -> (i32, i32) {
    %c0_i32 = arith.constant 0 : i32
    %c0_i32_0 = arith.constant 0 : i32
    %c0_i32_1 = arith.constant 0 : i32
    return %c0_i32, %c0_i32_0 : i32, i32
  }
  func.func @transform_4(%arg0: i32) -> (i32, i32) {
    %c0_i32 = arith.constant 0 : i32
    %c0_i32_0 = arith.constant 0 : i32
    %c0_i32_1 = arith.constant 0 : i32
    return %c0_i32, %c0_i32_0 : i32, i32
  }
  func.func @transform_5(%arg0: i32) -> (i32, i32) {
    %c0_i32 = arith.constant 0 : i32
    %c0_i32_0 = arith.constant 0 : i32
    %c0_i32_1 = arith.constant 0 : i32
    return %c0_i32, %c0_i32_0 : i32, i32
  }
  func.func @transform_6(%arg0: i32) -> (i32, i32) {
    %c0_i32 = arith.constant 0 : i32
    %c0_i32_0 = arith.constant 0 : i32
    %c0_i32_1 = arith.constant 0 : i32
    return %c0_i32, %c0_i32_0 : i32, i32
  }
  func.func @transform_7(%arg0: i32) -> (i32, i32) {
    %c0_i32 = arith.constant 0 : i32
    %c0_i32_0 = arith.constant 0 : i32
    return %arg0, %c0_i32 : i32, i32
  }
}

</mosaic_0001>

<llo_original>
// kernel: tpu_custom_call.1
$region0: #{tpu_custom_call.1}
  #allocation0 [shape = 'u32[]', space=smem, size = 0x4, offset = 0x4, fixed_abs, tag = 'smem constant byte address 0x4 - core index']
  #allocation1 [shape = 'u32[72,128]{1,0:T(1,128)}', space=vmem, size = 0x9000, scoped, tag = 'internal scratch']
  %s0 = inlined_call_operand.vmem [shape: f32[8,32], index: 0, kind: input, shape index: {}]
  %s1 = inlined_call_operand.hbm [shape: f32[32,128], index: 1, kind: input, shape index: {}]
  %s2 = inlined_call_operand.vmem [shape: f32[1,128], index: 2, kind: input, shape index: {}]
  %s3 = inlined_call_operand.vmem [shape: f32[128,128], index: 3, kind: input, shape index: {}]
  %s4 = inlined_call_operand.vmem [shape: f32[1,128], index: 4, kind: input, shape index: {}]
  %s5 = inlined_call_operand.vmem [shape: f32[128,8], index: 5, kind: input, shape index: {}]
  %s6 = inlined_call_operand.vmem [shape: f32[1,8], index: 6, kind: input, shape index: {}]
  %s7 = inlined_call_operand.hbm [shape: f32[8,8], index: 7, kind: output, shape index: {}]
  %s8 = sld [smem:[#allocation0]]
  $region42: #{tpu_custom_call.1} parent=0
    _
  %s10 = ssub.s32 1, %s8
  %s11 = scalar_select 0, %s10, %s8
  $region1: #{tpu_custom_call.1} parent=0
    #allocation2 [shape = 'u8[16384]{0}', space=vmem, size = 0x4000, scoped, tag = 'input window, operand 1, single buffered']
    #allocation3 [shape = 's32[1]{0}', space=sflag, size = 0x4, scoped, tag = 'scoped memory for tpu_custom_call.1']
    #allocation4 [shape = 's32[1]{0}', space=sflag, size = 0x4, scoped, tag = 'scoped memory for tpu_custom_call.1']
    #allocation5 [shape = 'u8[4096]{0}', space=vmem, size = 0x1000, scoped, tag = 'output window, operand 0, single buffered']
    %12 = vsyncpa [#allocation3], 0
    %13 = vsyncpa [#allocation4], 0
    // Predicated region
    $region2: #{tpu_custom_call.1} parent=1 // pred_check
      _
    $region3: #{tpu_custom_call.1} parent=1 // pred_check_branch
      %15 = sbr.rel (0) target = $region5
    $region4: #{tpu_custom_call.1} parent=1 // pred_region
      _
    $region5: #{tpu_custom_call.1} parent=1 // pred_fallthru
      _
    // Predicated region
    $region6: #{tpu_custom_call.1} parent=1 // pred_check
      _
    $region7: #{tpu_custom_call.1} parent=1 // pred_check_branch
      %17 = sbr.rel (0) target = $region9
    $region8: #{tpu_custom_call.1} parent=1 // pred_region
      %19 = vsyncadd [#allocation3], 0
      %s20 = sshll.u32 %s1, 4
      %s21 = int_to_ptr.hbm [resolvable:$true] %s20
      %s22 = sshll.u32 [#allocation2], 4
      %s23 = int_to_ptr.vmem [resolvable:$true] %s22
      %28 = dma.hbm_to_vmem [thread:$0]  %s21, 512, %s23, [#allocation3], 128, 128, 8
    $region9: #{tpu_custom_call.1} parent=1 // pred_fallthru
      _
    // Predicated region
    $region10: #{tpu_custom_call.1} parent=1 // pred_check
      _
    $region11: #{tpu_custom_call.1} parent=1 // pred_check_branch
      %30 = sbr.rel (0) target = $region13
    $region12: #{tpu_custom_call.1} parent=1 // pred_region
      _
    $region13: #{tpu_custom_call.1} parent=1 // pred_fallthru
      _
    // Predicated region
    $region14: #{tpu_custom_call.1} parent=1 // pred_check
      _
    $region15: #{tpu_custom_call.1} parent=1 // pred_check_branch
      %32 = sbr.rel (0) target = $region17
    $region16: #{tpu_custom_call.1} parent=1 // pred_region
      _
    $region17: #{tpu_custom_call.1} parent=1 // pred_fallthru
      _
    // Predicated region
    $region18: #{tpu_custom_call.1} parent=1 // pred_check
      _
    $region19: #{tpu_custom_call.1} parent=1 // pred_check_branch
      %34 = sbr.rel (0) target = $region21
    $region20: #{tpu_custom_call.1} parent=1 // pred_region
      _
    $region21: #{tpu_custom_call.1} parent=1 // pred_fallthru
      _
    // Predicated region
    $region22: #{tpu_custom_call.1} parent=1 // pred_check
      _
    $region23: #{tpu_custom_call.1} parent=1 // pred_check_branch
      %36 = sbr.rel (0) target = $region25
    $region24: #{tpu_custom_call.1} parent=1 // pred_region
      _
    $region25: #{tpu_custom_call.1} parent=1 // pred_fallthru
      _
    // Predicated region
    $region26: #{tpu_custom_call.1} parent=1 // pred_check
      _
    $region27: #{tpu_custom_call.1} parent=1 // pred_check_branch
      %38 = sbr.rel (0) target = $region29
    $region28: #{tpu_custom_call.1} parent=1 // pred_region
      _
    $region29: #{tpu_custom_call.1} parent=1 // pred_fallthru
      _
    // Predicated region
    $region30: #{tpu_custom_call.1} parent=1 // pred_check
      _
    $region31: #{tpu_custom_call.1} parent=1 // pred_check_branch
      %40 = sbr.rel (0) target = $region33
    $region32: #{tpu_custom_call.1} parent=1 // pred_region
      %42 = dma.done [#allocation3], 512
    $region33: #{tpu_custom_call.1} parent=1 // pred_fallthru
      _
    %v43 = vld [vmem:[%s0] sm:$0xff]
    %v44 = vld [vmem:[#allocation2] sm:$0xff]
    %v45 = vld [vmem:[#allocation2 + $0x8] sm:$0xff]
    %v46 = vld [vmem:[#allocation2 + $0x10] sm:$0xff]
    %v47 = vld [vmem:[#allocation2 + $0x18] sm:$0xff]
    %v48 = vld [vmem:[%s2] sm:$0x1]
    %v50 = vperm.slane %v48, 0
    %vm52 = vcmask 261120
    %v54 = vsel %vm52, %v43, 0
    %56 = vmatpush.msra.mxu0 0.0
    %57 = vmatpush.msra.mxu0 0.0
    %58 = vmatpush.msra.mxu0 0.0
    %59 = vmatpush.msra.mxu0 0.0
    %60 = vmatpush.msra.mxu0 0.0
    %61 = vmatpush.msra.mxu0 0.0
    %62 = vmatpush.msra.mxu0 0.0
    %63 = vmatpush.msra.mxu0 0.0
    %64 = vmatpush.msra.mxu0 0.0
    %65 = vmatpush.msra.mxu0 0.0
    %66 = vmatpush.msra.mxu0 0.0
    %67 = vmatpush.msra.mxu0 0.0
    %68 = vmatpush.msra.mxu0 %v47
    %69 = vmatpush.msra.mxu0 %v46
    %70 = vmatpush.msra.mxu0 %v45
    %71 = vmatpush.msra.mxu0 %v44
    %72 = vmatmul.f32.gmra.mxu0 %v54
    %v73 = vpop.f32.mrf.mxu0
    %v74 = vadd.f32 %v50, %v73
    %75 = vdwg.mxu0
    %v76 = vmax.f32 %v74, 0.0
    %v77 = vld [vmem:[%s3] sm:$0xff]
    %v78 = vld [vmem:[%s3 + $0x8] sm:$0xff]
    %v79 = vld [vmem:[%s3 + $0x10] sm:$0xff]
    %v80 = vld [vmem:[%s3 + $0x18] sm:$0xff]
    %v81 = vld [vmem:[%s3 + $0x20] sm:$0xff]
    %v82 = vld [vmem:[%s3 + $0x28] sm:$0xff]
    %v83 = vld [vmem:[%s3 + $0x30] sm:$0xff]
    %v84 = vld [vmem:[%s3 + $0x38] sm:$0xff]
    %v85 = vld [vmem:[%s3 + $0x40] sm:$0xff]
    %v86 = vld [vmem:[%s3 + $0x48] sm:$0xff]
    %v87 = vld [vmem:[%s3 + $0x50] sm:$0xff]
    %v88 = vld [vmem:[%s3 + $0x58] sm:$0xff]
    %v89 = vld [vmem:[%s3 + $0x60] sm:$0xff]
    %v90 = vld [vmem:[%s3 + $0x68] sm:$0xff]
    %v91 = vld [vmem:[%s3 + $0x70] sm:$0xff]
    %v92 = vld [vmem:[%s3 + $0x78] sm:$0xff]
    %v93 = vld [vmem:[%s4] sm:$0x1]
    %v95 = vperm.slane %v93, 0
    %97 = vmatpush.msra.mxu0 %v92
    %98 = vmatpush.msra.mxu0 %v91
    %99 = vmatpush.msra.mxu0 %v90
    %100 = vmatpush.msra.mxu0 %v89
    %101 = vmatpush.msra.mxu0 %v88
    %102 = vmatpush.msra.mxu0 %v87
    %103 = vmatpush.msra.mxu0 %v86
    %104 = vmatpush.msra.mxu0 %v85
    %105 = vmatpush.msra.mxu0 %v84
    %106 = vmatpush.msra.mxu0 %v83
    %107 = vmatpush.msra.mxu0 %v82
    %108 = vmatpush.msra.mxu0 %v81
    %109 = vmatpush.msra.mxu0 %v80
    %110 = vmatpush.msra.mxu0 %v79
    %111 = vmatpush.msra.mxu0 %v78
    %112 = vmatpush.msra.mxu0 %v77
    %113 = vmatmul.f32.gmra.mxu0 %v76
    %v114 = vpop.f32.mrf.mxu0
    %v115 = vadd.f32 %v95, %v114
    %116 = vdwg.mxu0
    %v117 = vmax.f32 %v115, 0.0
    %v118 = vld [vmem:[%s5] sm:$0xff]
    %v119 = vld [vmem:[%s5 + $0x8] sm:$0xff]
    %v120 = vld [vmem:[%s5 + $0x10] sm:$0xff]
    %v121 = vld [vmem:[%s5 + $0x18] sm:$0xff]
    %v122 = vld [vmem:[%s5 + $0x20] sm:$0xff]
    %v123 = vld [vmem:[%s5 + $0x28] sm:$0xff]
    %v124 = vld [vmem:[%s5 + $0x30] sm:$0xff]
    %v125 = vld [vmem:[%s5 + $0x38] sm:$0xff]
    %v126 = vld [vmem:[%s5 + $0x40] sm:$0xff]
    %v127 = vld [vmem:[%s5 + $0x48] sm:$0xff]
    %v128 = vld [vmem:[%s5 + $0x50] sm:$0xff]
    %v129 = vld [vmem:[%s5 + $0x58] sm:$0xff]
    %v130 = vld [vmem:[%s5 + $0x60] sm:$0xff]
    %v131 = vld [vmem:[%s5 + $0x68] sm:$0xff]
    %v132 = vld [vmem:[%s5 + $0x70] sm:$0xff]
    %v133 = vld [vmem:[%s5 + $0x78] sm:$0xff]
    %v134 = vld [vmem:[%s6] sm:$0x1]
    %v136 = vperm.slane %v134, 0
    %138 = vmatpush.msra.mxu0 %v133
    %139 = vmatpush.msra.mxu0 %v132
    %140 = vmatpush.msra.mxu0 %v131
    %141 = vmatpush.msra.mxu0 %v130
    %142 = vmatpush.msra.mxu0 %v129
    %143 = vmatpush.msra.mxu0 %v128
    %144 = vmatpush.msra.mxu0 %v127
    %145 = vmatpush.msra.mxu0 %v126
    %146 = vmatpush.msra.mxu0 %v125
    %147 = vmatpush.msra.mxu0 %v124
    %148 = vmatpush.msra.mxu0 %v123
    %149 = vmatpush.msra.mxu0 %v122
    %150 = vmatpush.msra.mxu0 %v121
    %151 = vmatpush.msra.mxu0 %v120
    %152 = vmatpush.msra.mxu0 %v119
    %153 = vmatpush.msra.mxu0 %v118
    %154 = vmatmul.f32.gmra.mxu0 %v117
    %v155 = vpop.f32.mrf.mxu0
    %v156 = vadd.f32 %v136, %v155
    %157 = vdwg.mxu0
    %vm158 = vcmask 64512
    %159 = vst.msk [vmem:[#allocation5] sm:$0xff] %vm158, %v156
    // Predicated region
    $region34: #{tpu_custom_call.1} parent=1 // pred_check
      _
    $region35: #{tpu_custom_call.1} parent=1 // pred_check_branch
      %161 = sbr.rel (0) target = $region37
    $region36: #{tpu_custom_call.1} parent=1 // pred_region
      %163 = vsyncadd [#allocation4], 0
      %s165 = sshll.u32 [#allocation5], 4
      %s166 = int_to_ptr.vmem [resolvable:$true] %s165
      %s167 = sshll.u32 %s7, 4
      %s168 = int_to_ptr.hbm [resolvable:$true] %s167
      %170 = dma.vmem_to_hbm [thread:$0]  %s166, 128, %s168, [#allocation4]
    $region37: #{tpu_custom_call.1} parent=1 // pred_fallthru
      _
    // Predicated region
    $region38: #{tpu_custom_call.1} parent=1 // pred_check
      _
    $region39: #{tpu_custom_call.1} parent=1 // pred_check_branch
      %172 = sbr.rel (0) target = $region41
    $region40: #{tpu_custom_call.1} parent=1 // pred_region
      %174 = dma.done [#allocation4], 128
    $region41: #{tpu_custom_call.1} parent=1 // pred_fallthru
      _
    %175 = vsyncpa [#allocation3], 1
    %176 = vsyncpa [#allocation4], 1

</llo_original>
